<compile_context>
chip_gen: v5e
topology: v5e:2x2
jax: 0.10.0
libtpu: 0.0.40
codegen_flags: <defaults>
</compile_context>

<pallas_src>
import functools

import jax
import jax.numpy as jnp
from jax import lax
from jax.experimental import pallas as pl
from jax.experimental.pallas import tpu as pltpu

BN_EPS = 1e-5
LANE = 128
NEG_INF = -1e30  # bias for padded softmax columns -> exp underflows to exactly 0


def _round_up(n, m):
    return ((n + m - 1) // m) * m


def privatednet_kernel(x_ref, w1_ref, gamma_ref, beta_ref, w3_ref, b3_ref, o_ref):
    # ---- fc1: bf16 operands on the MXU, f32 accumulation.  No bias: BN cancels it. ----
    h = jnp.dot(x_ref[...], w1_ref[...], preferred_element_type=jnp.float32)  # (B, F1p) f32

    # ---- bn1 (training mode) fused into a single pass over h ----
    inv_b = 1.0 / h.shape[0]                                       # static scalar
    mean = jnp.sum(h, axis=0, keepdims=True) * inv_b               # E[h]
    ex2 = jnp.sum(h * h, axis=0, keepdims=True) * inv_b            # E[h^2]
    var = jnp.maximum(ex2 - mean * mean, 0.0)                      # clamp: no NaN from cancellation
    scale = gamma_ref[...] * lax.rsqrt(var + BN_EPS)
    shift = beta_ref[...] - mean * scale
    # bn + relu as one fused multiply-add + max (padded cols: gamma=0 -> scale=shift=0 -> stay 0)
    h_act = jnp.maximum(h * scale + shift, 0.0)

    # ---- fc3 (bf16 activations on the MXU, f32 accumulation) ----
    logits = jnp.dot(h_act.astype(jnp.bfloat16), w3_ref[...],
                     preferred_element_type=jnp.float32) + b3_ref[...]        # (B, Cp) f32

    # ---- softmax over dim=1; padded class columns carry -1e30 bias -> exp == 0 ----
    m = jnp.max(logits, axis=1, keepdims=True)
    e = jnp.exp(logits - m)
    denom = jnp.sum(e, axis=1, keepdims=True)
    # Exact divide: approx reciprocal's ~bf16-level error broke the row-sum tolerance.
    o_ref[...] = e / denom


def prepare_params(w1, gamma, beta, w3, b3):
    """One-time weight-side padding + bf16 casting (hoisted out of the per-call path)."""
    D, F1 = w1.shape
    C = w3.shape[1]
    Dp, F1p, Cp = _round_up(D, LANE), _round_up(F1, LANE), _round_up(C, LANE)
    w1_p = jnp.pad(w1, ((0, Dp - D), (0, F1p - F1))).astype(jnp.bfloat16)
    gamma_p = jnp.pad(gamma, ((0, 0), (0, F1p - F1)))                  # pad gamma with 0
    beta_p = jnp.pad(beta, ((0, 0), (0, F1p - F1)))
    w3_p = jnp.pad(w3, ((0, F1p - F1), (0, Cp - C))).astype(jnp.bfloat16)
    b3_p = jnp.pad(b3, ((0, 0), (0, Cp - C)), constant_values=NEG_INF)  # kill padded classes
    return w1_p, gamma_p, beta_p, w3_p, b3_p


@functools.partial(jax.jit, static_argnames=("out_size",))
def privatednet_forward(x, w1_p, gamma_p, beta_p, w3_p, b3_p, *, out_size):
    """x: (B, D) f32.  Padded/cast params from prepare_params().  Returns (B, out_size) f32."""
    B, D = x.shape
    Dp, F1p = w1_p.shape
    Cp = w3_p.shape[1]

    x_p = jnp.pad(x, ((0, 0), (0, Dp - D))).astype(jnp.bfloat16)

    flops = 2 * B * Dp * F1p + 2 * B * F1p * Cp
    bytes_accessed = (x_p.size * 2 + w1_p.size * 2 + w3_p.size * 2
                      + (gamma_p.size + beta_p.size + b3_p.size + B * Cp) * 4)

    vmem = pl.BlockSpec(memory_space=pltpu.MemorySpace.VMEM)
    out_p = pl.pallas_call(
        privatednet_kernel,
        out_shape=jax.ShapeDtypeStruct((B, Cp), jnp.float32),
        in_specs=[vmem] * 6,
        out_specs=vmem,
        cost_estimate=pl.CostEstimate(
            flops=flops, transcendentals=B * Cp + F1p, bytes_accessed=bytes_accessed),
    )(x_p, w1_p, gamma_p, beta_p, w3_p, b3_p)
    return out_p[:, :out_size]


def init_params(key, input_size, fc1_len, output_size):
    """Deterministic synthetic parameter init (PyTorch-Linear-style uniform ranges)."""
    k1, k2, k3, k4 = jax.random.split(key, 4)
    bound1 = 1.0 / (input_size ** 0.5)
    bound3 = 1.0 / (fc1_len ** 0.5)
    # Pre-transposed weights: (in_features, out_features)
    w1 = jax.random.uniform(k1, (input_size, fc1_len), jnp.float32, -bound1, bound1)
    b1 = jax.random.uniform(k2, (1, fc1_len), jnp.float32, -bound1, bound1)
    gamma = jnp.ones((1, fc1_len), jnp.float32)      # BatchNorm1d default weight
    beta = jnp.zeros((1, fc1_len), jnp.float32)      # BatchNorm1d default bias
    w3 = jax.random.uniform(k3, (fc1_len, output_size), jnp.float32, -bound3, bound3)
    b3 = jax.random.uniform(k4, (1, output_size), jnp.float32, -bound3, bound3)
    # fc2 / bn2 exist in __init__ but are unused in forward() -> not materialized.
    return w1, b1, gamma, beta, w3, b3


def reference_forward(x, w1, b1, gamma, beta, w3, b3):
    """Pure-JAX f32 reference matching the PyTorch forward (includes the fc1 bias)."""
    h = x @ w1 + b1
    mean = jnp.mean(h, axis=0, keepdims=True)
    var = jnp.mean((h - mean) ** 2, axis=0, keepdims=True)
    h = (h - mean) / jnp.sqrt(var + BN_EPS) * gamma + beta
    h = jnp.maximum(h, 0.0)
    logits = h @ w3 + b3
    return jax.nn.softmax(logits, axis=1)


if __name__ == "__main__":
    # Small shapes implied by the module (config[name] supplies fc1_len / fc2_len).
    batch = 8
    input_size = 32
    fc1_len = 64
    output_size = 16

    key = jax.random.PRNGKey(0)
    kx, kp = jax.random.split(key)
    x = jax.random.normal(kx, (batch, input_size), jnp.float32)
    w1, b1, gamma, beta, w3, b3 = init_params(kp, input_size, fc1_len, output_size)

    # One-time weight prep, then the jitted forward (pad-x -> kernel -> slice).
    packed = prepare_params(w1, gamma, beta, w3, b3)
    out = privatednet_forward(x, *packed, out_size=output_size)
    out = jax.block_until_ready(out)

    ref = reference_forward(x, w1, b1, gamma, beta, w3, b3)
    assert out.shape == (batch, output_size)
    assert bool(jnp.all(jnp.isfinite(out)))
    # Exact divide -> row sums equal 1 to f32 precision.
    assert jnp.allclose(jnp.sum(out, axis=1), 1.0, atol=1e-3)
    # bf16 matmul inputs vs. full-f32 reference -> loose tolerance.
    assert jnp.allclose(out, ref, atol=2e-2, rtol=2e-2)

    print("KERNEL_OK")
</pallas_src>

<mosaic_0001>
module attributes {stable_mosaic.version = 11 : i64} {
  func.func @privatednet_kernel(%arg0: memref<8x128xbf16, #tpu.memory_space<vmem>>, %arg1: memref<128x128xbf16, #tpu.memory_space<vmem>>, %arg2: memref<1x128xf32, #tpu.memory_space<vmem>>, %arg3: memref<1x128xf32, #tpu.memory_space<vmem>>, %arg4: memref<128x128xbf16, #tpu.memory_space<vmem>>, %arg5: memref<1x128xf32, #tpu.memory_space<vmem>>, %arg6: memref<8x128xf32, #tpu.memory_space<vmem>>) attributes {dimension_semantics = [], scalar_prefetch = 0 : i64, scratch_operands = 0 : i64, tpu.core_type = #tpu.core_type<tc>} {
    %c0 = arith.constant 0 : index
    %c0_0 = arith.constant 0 : index
    %0 = vector.load %arg0[%c0, %c0_0] : memref<8x128xbf16, #tpu.memory_space<vmem>>, vector<8x128xbf16>
    %c0_1 = arith.constant 0 : index
    %c0_2 = arith.constant 0 : index
    %1 = vector.load %arg1[%c0_1, %c0_2] : memref<128x128xbf16, #tpu.memory_space<vmem>>, vector<128x128xbf16>
    %cst = arith.constant dense<0.000000e+00> : vector<8x128xf32>
    %2 = tpu.matmul %0, %1, %cst {dimension_numbers = #tpu.dot_dimension_numbers<[1], [0], [0], [1], [0, 0, 1, 1], [], []>} : vector<8x128xbf16>, vector<128x128xbf16>, vector<8x128xf32> -> vector<8x128xf32>
    %cst_3 = arith.constant dense<0.000000e+00> : vector<128xf32>
    %3 = vector.multi_reduction <add>, %2, %cst_3 [0] : vector<8x128xf32> to vector<128xf32>
    %4 = vector.shape_cast %3 : vector<128xf32> to vector<1x128xf32>
    %cst_4 = arith.constant 1.250000e-01 : f32
    %5 = vector.broadcast %cst_4 : f32 to vector<1x128xf32>
    %6 = arith.mulf %4, %5 : vector<1x128xf32>
    %7 = arith.mulf %2, %2 : vector<8x128xf32>
    %cst_5 = arith.constant dense<0.000000e+00> : vector<128xf32>
    %8 = vector.multi_reduction <add>, %7, %cst_5 [0] : vector<8x128xf32> to vector<128xf32>
    %9 = vector.shape_cast %8 : vector<128xf32> to vector<1x128xf32>
    %cst_6 = arith.constant 1.250000e-01 : f32
    %10 = vector.broadcast %cst_6 : f32 to vector<1x128xf32>
    %11 = arith.mulf %9, %10 : vector<1x128xf32>
    %12 = arith.mulf %6, %6 : vector<1x128xf32>
    %13 = arith.subf %11, %12 : vector<1x128xf32>
    %cst_7 = arith.constant 0.000000e+00 : f32
    %14 = vector.broadcast %cst_7 : f32 to vector<1x128xf32>
    %15 = arith.maximumf %13, %14 : vector<1x128xf32>
    %c0_8 = arith.constant 0 : index
    %c0_9 = arith.constant 0 : index
    %16 = vector.load %arg2[%c0_8, %c0_9] : memref<1x128xf32, #tpu.memory_space<vmem>>, vector<1x128xf32>
    %cst_10 = arith.constant 9.99999974E-6 : f32
    %17 = vector.broadcast %cst_10 : f32 to vector<1x128xf32>
    %18 = arith.addf %15, %17 : vector<1x128xf32>
    %19 = math.rsqrt %18 : vector<1x128xf32>
    %20 = arith.mulf %16, %19 : vector<1x128xf32>
    %c0_11 = arith.constant 0 : index
    %c0_12 = arith.constant 0 : index
    %21 = vector.load %arg3[%c0_11, %c0_12] : memref<1x128xf32, #tpu.memory_space<vmem>>, vector<1x128xf32>
    %22 = arith.mulf %6, %20 : vector<1x128xf32>
    %23 = arith.subf %21, %22 : vector<1x128xf32>
    %24 = vector.broadcast %20 : vector<1x128xf32> to vector<8x128xf32>
    %25 = arith.mulf %2, %24 : vector<8x128xf32>
    %26 = vector.broadcast %23 : vector<1x128xf32> to vector<8x128xf32>
    %27 = arith.addf %25, %26 : vector<8x128xf32>
    %cst_13 = arith.constant 0.000000e+00 : f32
    %28 = vector.broadcast %cst_13 : f32 to vector<8x128xf32>
    %29 = arith.maximumf %27, %28 : vector<8x128xf32>
    %30 = arith.truncf %29 : vector<8x128xf32> to vector<8x128xbf16>
    %c0_14 = arith.constant 0 : index
    %c0_15 = arith.constant 0 : index
    %31 = vector.load %arg4[%c0_14, %c0_15] : memref<128x128xbf16, #tpu.memory_space<vmem>>, vector<128x128xbf16>
    %cst_16 = arith.constant dense<0.000000e+00> : vector<8x128xf32>
    %32 = tpu.matmul %30, %31, %cst_16 {dimension_numbers = #tpu.dot_dimension_numbers<[1], [0], [0], [1], [0, 0, 1, 1], [], []>} : vector<8x128xbf16>, vector<128x128xbf16>, vector<8x128xf32> -> vector<8x128xf32>
    %c0_17 = arith.constant 0 : index
    %c0_18 = arith.constant 0 : index
    %33 = vector.load %arg5[%c0_17, %c0_18] : memref<1x128xf32, #tpu.memory_space<vmem>>, vector<1x128xf32>
    %34 = vector.broadcast %33 : vector<1x128xf32> to vector<8x128xf32>
    %35 = arith.addf %32, %34 : vector<8x128xf32>
    %cst_19 = arith.constant dense<0xFF800000> : vector<8xf32>
    %36 = vector.multi_reduction <maximumf>, %35, %cst_19 [1] : vector<8x128xf32> to vector<8xf32>
    %37 = vector.shape_cast %36 : vector<8xf32> to vector<8x1xf32>
    %38 = vector.broadcast %37 : vector<8x1xf32> to vector<8x128xf32>
    %39 = arith.subf %35, %38 : vector<8x128xf32>
    %40 = math.exp %39 : vector<8x128xf32>
    %cst_20 = arith.constant dense<0.000000e+00> : vector<8xf32>
    %41 = vector.multi_reduction <add>, %40, %cst_20 [1] : vector<8x128xf32> to vector<8xf32>
    %42 = vector.shape_cast %41 : vector<8xf32> to vector<8x1xf32>
    %43 = vector.broadcast %42 : vector<8x1xf32> to vector<8x128xf32>
    %44 = arith.divf %40, %43 : vector<8x128xf32>
    %c0_21 = arith.constant 0 : index
    %c0_22 = arith.constant 0 : index
    %45 = vector.load %arg6[%c0_21, %c0_22] : memref<8x128xf32, #tpu.memory_space<vmem>>, vector<8x128xf32>
    tpu.vector_store %arg6[%c0_21, %c0_22], %44 {strides = array<i32>} : memref<8x128xf32, #tpu.memory_space<vmem>>, vector<8x128xf32>,
    return
  }
}

</mosaic_0001>

<llo_original>
// kernel: privatednet_forward.1
$region0: #{privatednet_forward.1}
  #allocation0 [shape = 'u32[]', space=smem, size = 0x4, offset = 0x4, fixed_abs, tag = 'smem constant byte address 0x4 - core index']
  #allocation1 [shape = 'u32[72,128]{1,0:T(1,128)}', space=vmem, size = 0x9000, scoped, tag = 'internal scratch']
  %s0 = inlined_call_operand.vmem [shape: bf16[8,128], index: 0, kind: input, shape index: {}]
  %s1 = inlined_call_operand.hbm [shape: bf16[128,128], index: 1, kind: input, shape index: {}]
  %s2 = inlined_call_operand.vmem [shape: f32[1,128], index: 2, kind: input, shape index: {}]
  %s3 = inlined_call_operand.vmem [shape: f32[1,128], index: 3, kind: input, shape index: {}]
  %s4 = inlined_call_operand.hbm [shape: bf16[128,128], index: 4, kind: input, shape index: {}]
  %s5 = inlined_call_operand.vmem [shape: f32[1,128], index: 5, kind: input, shape index: {}]
  %s6 = inlined_call_operand.hbm [shape: f32[8,128], index: 6, kind: output, shape index: {}]
  %s7 = sld [smem:[#allocation0]]
  $region42: #{privatednet_forward.1} parent=0
    _
  %s9 = ssub.s32 1, %s7
  %s10 = scalar_select 0, %s9, %s7
  $region1: #{privatednet_forward.1} parent=0
    #allocation2 [shape = 'u8[32768]{0}', space=vmem, size = 0x8000, scoped, tag = 'input window, operand 1, single buffered']
    #allocation3 [shape = 's32[1]{0}', space=sflag, size = 0x4, scoped, tag = 'scoped memory for privatednet_forward.1']
    #allocation4 [shape = 's32[1]{0}', space=sflag, size = 0x4, scoped, tag = 'scoped memory for privatednet_forward.1']
    #allocation5 [shape = 'u8[32768]{0}', space=vmem, size = 0x8000, scoped, tag = 'input window, operand 4, single buffered']
    #allocation6 [shape = 's32[1]{0}', space=sflag, size = 0x4, scoped, tag = 'scoped memory for privatednet_forward.1']
    #allocation7 [shape = 'u8[4096]{0}', space=vmem, size = 0x1000, scoped, tag = 'output window, operand 0, single buffered']
    %11 = vsyncpa [#allocation3], 0
    %12 = vsyncpa [#allocation6], 0
    %13 = vsyncpa [#allocation4], 0
    // Predicated region
    $region2: #{privatednet_forward.1} parent=1 // pred_check
      _
    $region3: #{privatednet_forward.1} parent=1 // pred_check_branch
      %15 = sbr.rel (0) target = $region5
    $region4: #{privatednet_forward.1} parent=1 // pred_region
      _
    $region5: #{privatednet_forward.1} parent=1 // pred_fallthru
      _
    // Predicated region
    $region6: #{privatednet_forward.1} parent=1 // pred_check
      _
    $region7: #{privatednet_forward.1} parent=1 // pred_check_branch
      %17 = sbr.rel (0) target = $region9
    $region8: #{privatednet_forward.1} parent=1 // pred_region
      %19 = vsyncadd [#allocation3], 0
      %s20 = sshll.u32 %s1, 4
      %s21 = int_to_ptr.hbm [resolvable:$true] %s20
      %s22 = sshll.u32 [#allocation2], 4
      %s23 = int_to_ptr.vmem [resolvable:$true] %s22
      %28 = dma.hbm_to_vmem [thread:$0]  %s21, 1024, %s23, [#allocation3], 64, 64, 4
    $region9: #{privatednet_forward.1} parent=1 // pred_fallthru
      _
    // Predicated region
    $region10: #{privatednet_forward.1} parent=1 // pred_check
      _
    $region11: #{privatednet_forward.1} parent=1 // pred_check_branch
      %30 = sbr.rel (0) target = $region13
    $region12: #{privatednet_forward.1} parent=1 // pred_region
      _
    $region13: #{privatednet_forward.1} parent=1 // pred_fallthru
      _
    // Predicated region
    $region14: #{privatednet_forward.1} parent=1 // pred_check
      _
    $region15: #{privatednet_forward.1} parent=1 // pred_check_branch
      %32 = sbr.rel (0) target = $region17
    $region16: #{privatednet_forward.1} parent=1 // pred_region
      _
    $region17: #{privatednet_forward.1} parent=1 // pred_fallthru
      _
    // Predicated region
    $region18: #{privatednet_forward.1} parent=1 // pred_check
      _
    $region19: #{privatednet_forward.1} parent=1 // pred_check_branch
      %34 = sbr.rel (0) target = $region21
    $region20: #{privatednet_forward.1} parent=1 // pred_region
      %36 = vsyncadd [#allocation6], 0
      %s37 = sshll.u32 %s4, 4
      %s38 = int_to_ptr.hbm [resolvable:$true] %s37
      %s39 = sshll.u32 [#allocation5], 4
      %s40 = int_to_ptr.vmem [resolvable:$true] %s39
      %45 = dma.hbm_to_vmem [thread:$0]  %s38, 1024, %s40, [#allocation6], 64, 64, 4
    $region21: #{privatednet_forward.1} parent=1 // pred_fallthru
      _
    // Predicated region
    $region22: #{privatednet_forward.1} parent=1 // pred_check
      _
    $region23: #{privatednet_forward.1} parent=1 // pred_check_branch
      %47 = sbr.rel (0) target = $region25
    $region24: #{privatednet_forward.1} parent=1 // pred_region
      _
    $region25: #{privatednet_forward.1} parent=1 // pred_fallthru
      _
    // Predicated region
    $region26: #{privatednet_forward.1} parent=1 // pred_check
      _
    $region27: #{privatednet_forward.1} parent=1 // pred_check_branch
      %49 = sbr.rel (0) target = $region29
    $region28: #{privatednet_forward.1} parent=1 // pred_region
      %51 = dma.done [#allocation3], 1024
    $region29: #{privatednet_forward.1} parent=1 // pred_fallthru
      _
    // Predicated region
    $region30: #{privatednet_forward.1} parent=1 // pred_check
      _
    $region31: #{privatednet_forward.1} parent=1 // pred_check_branch
      %53 = sbr.rel (0) target = $region33
    $region32: #{privatednet_forward.1} parent=1 // pred_region
      %55 = dma.done [#allocation6], 1024
    $region33: #{privatednet_forward.1} parent=1 // pred_fallthru
      _
    %v56 = vld [vmem:[%s0] sm:$0xf]
    %v57 = vld [vmem:[#allocation2] sm:$0xf]
    %v58 = vld [vmem:[#allocation2 + $0x4] sm:$0xf]
    %v59 = vld [vmem:[#allocation2 + $0x8] sm:$0xf]
    %v60 = vld [vmem:[#allocation2 + $0xc] sm:$0xf]
    %v61 = vld [vmem:[#allocation2 + $0x10] sm:$0xf]
    %v62 = vld [vmem:[#allocation2 + $0x14] sm:$0xf]
    %v63 = vld [vmem:[#allocation2 + $0x18] sm:$0xf]
    %v64 = vld [vmem:[#allocation2 + $0x1c] sm:$0xf]
    %v65 = vld [vmem:[#allocation2 + $0x20] sm:$0xf]
    %v66 = vld [vmem:[#allocation2 + $0x24] sm:$0xf]
    %v67 = vld [vmem:[#allocation2 + $0x28] sm:$0xf]
    %v68 = vld [vmem:[#allocation2 + $0x2c] sm:$0xf]
    %v69 = vld [vmem:[#allocation2 + $0x30] sm:$0xf]
    %v70 = vld [vmem:[#allocation2 + $0x34] sm:$0xf]
    %v71 = vld [vmem:[#allocation2 + $0x38] sm:$0xf]
    %v72 = vld [vmem:[#allocation2 + $0x3c] sm:$0xf]
    %v89 = vunpack.c.l.b16 %v57
    %v90 = vunpack.c.l.b16 %v58
    %v91 = vunpack.c.l.b16 %v59
    %v92 = vunpack.c.l.b16 %v60
    %v93 = vunpack.c.l.b16 %v61
    %v94 = vunpack.c.l.b16 %v62
    %v95 = vunpack.c.l.b16 %v63
    %v96 = vunpack.c.l.b16 %v64
    %v97 = vunpack.c.l.b16 %v65
    %v98 = vunpack.c.l.b16 %v66
    %v99 = vunpack.c.l.b16 %v67
    %v100 = vunpack.c.l.b16 %v68
    %v101 = vunpack.c.l.b16 %v69
    %v102 = vunpack.c.l.b16 %v70
    %v103 = vunpack.c.l.b16 %v71
    %v104 = vunpack.c.l.b16 %v72
    %v105 = vpack.c.b16 %v90, %v89
    %v106 = vpack.c.b16 %v92, %v91
    %v107 = vpack.c.b16 %v94, %v93
    %v108 = vpack.c.b16 %v96, %v95
    %v109 = vpack.c.b16 %v98, %v97
    %v110 = vpack.c.b16 %v100, %v99
    %v111 = vpack.c.b16 %v102, %v101
    %v112 = vpack.c.b16 %v104, %v103
    %121 = vmatpush.bf16.msra.mxu0 %v112
    %122 = vmatpush.bf16.msra.mxu0 %v111
    %123 = vmatpush.bf16.msra.mxu0 %v110
    %124 = vmatpush.bf16.msra.mxu0 %v109
    %125 = vmatpush.bf16.msra.mxu0 %v108
    %126 = vmatpush.bf16.msra.mxu0 %v107
    %127 = vmatpush.bf16.msra.mxu0 %v106
    %128 = vmatpush.bf16.msra.mxu0 %v105
    %129 = vmatmul.bf16.gmra.mxu0 %v56
    %v130 = vpop.f32.mrf.mxu0
    %v131 = vadd.f32 0.0, %v130
    %v132 = vpop.f32.mrf.mxu0
    %133 = vdwg.mxu0
    %v134 = vrot.slane %v131, 4
    %v135 = vadd.f32 %v131, %v134
    %v136 = vrot.slane %v135, 2
    %v137 = vadd.f32 %v135, %v136
    %v138 = vrot.slane %v137, 1
    %v139 = vadd.f32 %v137, %v138
    %v140 = vmul.f32 %v139, 0.125
    %v141 = vmul.f32 %v131, %v131
    %v142 = vrot.slane %v141, 4
    %v143 = vadd.f32 %v141, %v142
    %v144 = vrot.slane %v143, 2
    %v145 = vadd.f32 %v143, %v144
    %v146 = vrot.slane %v145, 1
    %v147 = vadd.f32 %v145, %v146
    %v148 = vmul.f32 %v147, 0.125
    %v149 = vmul.f32 %v140, %v140
    %v150 = vsub.f32 %v148, %v149
    %v151 = vmax.f32 %v150, 0.0
    %v152 = vld [vmem:[%s2] sm:$0x1]
    %v153 = vadd.f32 %v151, 1e-05
    %v154 = vrsqrt.pop %v153
    %v155 = vmul.f32 %v154, %v153
    %v156 = vmul.f32 %v155, %v154
    %v157 = vmul.f32 0.5, %v156
    %v158 = vsub.f32 1.5, %v157
    %v159 = vmul.f32 %v154, %v158
    %vm160 = vweird.f32 %v153
    %vm161 = vweird.f32 %v154
    %vm162 = vmor %vm160, %vm161
    %v163 = vsel %vm162, %v154, %v159
    %v164 = vmul.f32 %v152, %v163
    %v165 = vld [vmem:[%s3] sm:$0x1]
    %v166 = vmul.f32 %v140, %v164
    %v167 = vsub.f32 %v165, %v166
    %v169 = vperm.slane %v164, 0
    %v171 = vmul.f32 %v131, %v169
    %v173 = vperm.slane %v167, 0
    %v175 = vadd.f32 %v171, %v173
    %v176 = vmax.f32 %v175, 0.0
    %v177 = vpack.c.bf16 %v176, %v176
    %v178 = vld [vmem:[#allocation5] sm:$0xf]
    %v179 = vld [vmem:[#allocation5 + $0x4] sm:$0xf]
    %v180 = vld [vmem:[#allocation5 + $0x8] sm:$0xf]
    %v181 = vld [vmem:[#allocation5 + $0xc] sm:$0xf]
    %v182 = vld [vmem:[#allocation5 + $0x10] sm:$0xf]
    %v183 = vld [vmem:[#allocation5 + $0x14] sm:$0xf]
    %v184 = vld [vmem:[#allocation5 + $0x18] sm:$0xf]
    %v185 = vld [vmem:[#allocation5 + $0x1c] sm:$0xf]
    %v186 = vld [vmem:[#allocation5 + $0x20] sm:$0xf]
    %v187 = vld [vmem:[#allocation5 + $0x24] sm:$0xf]
    %v188 = vld [vmem:[#allocation5 + $0x28] sm:$0xf]
    %v189 = vld [vmem:[#allocation5 + $0x2c] sm:$0xf]
    %v190 = vld [vmem:[#allocation5 + $0x30] sm:$0xf]
    %v191 = vld [vmem:[#allocation5 + $0x34] sm:$0xf]
    %v192 = vld [vmem:[#allocation5 + $0x38] sm:$0xf]
    %v193 = vld [vmem:[#allocation5 + $0x3c] sm:$0xf]
    %v194 = vld [vmem:[%s5] sm:$0x1]
    %v196 = vperm.slane %v194, 0
    %v214 = vunpack.c.l.b16 %v178
    %v215 = vunpack.c.l.b16 %v179
    %v216 = vunpack.c.l.b16 %v180
    %v217 = vunpack.c.l.b16 %v181
    %v218 = vunpack.c.l.b16 %v182
    %v219 = vunpack.c.l.b16 %v183
    %v220 = vunpack.c.l.b16 %v184
    %v221 = vunpack.c.l.b16 %v185
    %v222 = vunpack.c.l.b16 %v186
    %v223 = vunpack.c.l.b16 %v187
    %v224 = vunpack.c.l.b16 %v188
    %v225 = vunpack.c.l.b16 %v189
    %v226 = vunpack.c.l.b16 %v190
    %v227 = vunpack.c.l.b16 %v191
    %v228 = vunpack.c.l.b16 %v192
    %v229 = vunpack.c.l.b16 %v193
    %v230 = vpack.c.b16 %v215, %v214
    %v231 = vpack.c.b16 %v217, %v216
    %v232 = vpack.c.b16 %v219, %v218
    %v233 = vpack.c.b16 %v221, %v220
    %v234 = vpack.c.b16 %v223, %v222
    %v235 = vpack.c.b16 %v225, %v224
    %v236 = vpack.c.b16 %v227, %v226
    %v237 = vpack.c.b16 %v229, %v228
    %246 = vmatpush.bf16.msra.mxu0 %v237
    %247 = vmatpush.bf16.msra.mxu0 %v236
    %248 = vmatpush.bf16.msra.mxu0 %v235
    %249 = vmatpush.bf16.msra.mxu0 %v234
    %250 = vmatpush.bf16.msra.mxu0 %v233
    %251 = vmatpush.bf16.msra.mxu0 %v232
    %252 = vmatpush.bf16.msra.mxu0 %v231
    %253 = vmatpush.bf16.msra.mxu0 %v230
    %254 = vmatmul.bf16.gmra.mxu0 %v177
    %v255 = vpop.f32.mrf.mxu0
    %v256 = vadd.f32 %v196, %v255
    %v257 = vpop.f32.mrf.mxu0
    %258 = vdwg.mxu0
    %259 = vmax.xlane.f32.xlu0 %v256
    %v260 = vpop.xlane.xlu0 %259
    %v261 = vsub.f32 %v256, %v260
    %v262 = vmul.f32 %v261, 1.442695
    %v263 = vpow.pop %v262
    %264 = vadd.xlane.f32.xlu0 %v263
    %v265 = vpop.xlane.xlu0 %264
    %v266 = vrcp.pop %v265
    %v267 = vmul.f32 %v265, %v266
    %v268 = vsub.f32 1.0, %v267
    %v269 = vmul.f32 %v266, %v268
    %v270 = vadd.f32 %v266, %v269
    %vm271 = vweird.f32 %v265
    %vm272 = vweird.f32 %v266
    %vm273 = vmor %vm271, %vm272
    %v274 = vsel %vm273, %v266, %v270
    %v275 = vand.u32 2147483647, %v265
    %vm276 = vcmp.eq.f32.partialorder %v275, 8.507059e+37
    %v277 = vand.u32 %v265, 2147483648
    %v278 = vor.u32 1.1754944e-38, %v277
    %v279 = vsel %vm276, %v278, %v274
    %v280 = vmul.f32 %v263, %v279
    %281 = vst [vmem:[#allocation7] sm:$0xff] %v280
    // Predicated region
    $region34: #{privatednet_forward.1} parent=1 // pred_check
      _
    $region35: #{privatednet_forward.1} parent=1 // pred_check_branch
      %283 = sbr.rel (0) target = $region37
    $region36: #{privatednet_forward.1} parent=1 // pred_region
      %285 = vsyncadd [#allocation4], 0
      %s287 = sshll.u32 [#allocation7], 4
      %s288 = int_to_ptr.vmem [resolvable:$true] %s287
      %s289 = sshll.u32 %s6, 4
      %s290 = int_to_ptr.hbm [resolvable:$true] %s289
      %292 = dma.vmem_to_hbm [thread:$0]  %s288, 128, %s290, [#allocation4]
    $region37: #{privatednet_forward.1} parent=1 // pred_fallthru
      _
    // Predicated region
    $region38: #{privatednet_forward.1} parent=1 // pred_check
      _
    $region39: #{privatednet_forward.1} parent=1 // pred_check_branch
      %294 = sbr.rel (0) target = $region41
    $region40: #{privatednet_forward.1} parent=1 // pred_region
      %296 = dma.done [#allocation4], 128
    $region41: #{privatednet_forward.1} parent=1 // pred_fallthru
      _
    %297 = vsyncpa [#allocation3], 1
    %298 = vsyncpa [#allocation6], 1
    %299 = vsyncpa [#allocation4], 1

</llo_original>
